<compile_context>
chip_gen: v7x
topology: tpu7x:2x2x1
jax: 0.10.0
libtpu: 0.0.40
codegen_flags: <defaults>
</compile_context>

<pallas_src>
import math
from functools import partial

import jax
import jax.numpy as jnp
from jax.experimental import pallas as pl
from jax.experimental.pallas import tpu as pltpu

_NEG_INF = -1e30   # finite "minus infinity": avoids inf-inf NaN paths


# ----------------------------------------------------------------------------
# Helpers
# ----------------------------------------------------------------------------
def _round_up(x, m):
    return ((x + m - 1) // m) * m


def _pick_tile(n, candidates):
    """Largest candidate tile that exactly divides n, else the full extent."""
    for t in candidates:
        if t <= n and n % t == 0:
            return t
    return n


def _pad_axis(x, axis, target):
    cur = x.shape[axis]
    if cur == target:
        return x
    pads = [(0, 0)] * x.ndim
    pads[axis] = (0, target - cur)
    return jnp.pad(x, pads)


# ----------------------------------------------------------------------------
# Linear (y = x @ W + b): lane-dense GEMM, grid over (row tiles, col tiles)
# ----------------------------------------------------------------------------
def _linear_kernel(x_ref, w_ref, b_ref, o_ref):
    x = x_ref[...].astype(w_ref.dtype)          # bf16 MXU inputs
    acc = jnp.dot(x, w_ref[...], preferred_element_type=jnp.float32)
    o_ref[...] = (acc + b_ref[...]).astype(o_ref.dtype)


def _linear(x, w, b, out_dtype):
    """x: (M, K) float, w: (K, N) bf16, b: (N,) f32 -> (M, N) out_dtype."""
    M, K = x.shape
    Kw, N = w.shape
    assert K == Kw and M % 8 == 0

    xb = jnp.dtype(x.dtype).itemsize
    wb = jnp.dtype(w.dtype).itemsize
    ob = jnp.dtype(out_dtype).itemsize

    tn = _pick_tile(N, (512, 256, 128))
    budget = 24 << 20
    tm = 8
    for cand in (512, 256, 128, 64, 32, 16, 8):
        if M % cand:
            continue
        if 2 * (cand * K * xb + K * tn * wb + cand * tn * ob + tn * 4) <= budget:
            tm = cand
            break
    # Double-buffered operand footprint + small headroom for in-kernel temps.
    vmem = int(2 * (tm * K * xb + K * tn * wb + tm * tn * ob + tn * 4) + (4 << 20))

    b2 = b.astype(jnp.float32).reshape(1, N)
    grid = (M // tm, N // tn)
    return pl.pallas_call(
        _linear_kernel,
        out_shape=jax.ShapeDtypeStruct((M, N), out_dtype),
        grid=grid,
        in_specs=[
            pl.BlockSpec((tm, K), lambda i, j: (i, 0)),
            pl.BlockSpec((K, tn), lambda i, j: (0, j)),
            pl.BlockSpec((1, tn), lambda i, j: (0, j)),
        ],
        out_specs=pl.BlockSpec((tm, tn), lambda i, j: (i, j)),
        compiler_params=pltpu.CompilerParams(
            dimension_semantics=("parallel", "parallel"),
            vmem_limit_bytes=vmem),
    )(x, w, b2)


# ----------------------------------------------------------------------------
# Flash attention kernel (online softmax, kv axis is the trailing reduction)
# ----------------------------------------------------------------------------
def _flash_attn_kernel(*refs, with_mask: bool, kv_tail: bool, kv_len: int, tk: int):
    if with_mask:
        q_ref, k_ref, v_ref, mask_ref, o_ref, m_sc, l_sc, acc_sc = refs
    else:
        q_ref, k_ref, v_ref, o_ref, m_sc, l_sc, acc_sc = refs
        mask_ref = None

    ki = pl.program_id(3)

    @pl.when(ki == 0)
    def _init():
        m_sc[...] = jnp.full(m_sc.shape, _NEG_INF, jnp.float32)
        l_sc[...] = jnp.zeros(l_sc.shape, jnp.float32)
        acc_sc[...] = jnp.zeros(acc_sc.shape, jnp.float32)

    # (tq, tk) scores: bf16 MXU inputs, f32 accumulation. 1/sqrt(D) is already
    # folded into the Q projection weights.
    s = jax.lax.dot_general(
        q_ref[...], k_ref[...], (((1,), (1,)), ((), ())),
        preferred_element_type=jnp.float32)
    if with_mask:
        s = s + mask_ref[...].astype(jnp.float32)
    if kv_tail:
        # Mask key columns that only exist because of the 128-padding.
        col = ki * tk + jax.lax.broadcasted_iota(jnp.int32, s.shape, 1)
        s = jnp.where(col < kv_len, s, _NEG_INF)

    m_prev = m_sc[...]
    m_new = jnp.maximum(m_prev, jnp.max(s, axis=-1, keepdims=True))
    alpha = jnp.exp(m_prev - m_new)
    p = jnp.exp(s - m_new)

    l_sc[...] = alpha * l_sc[...] + jnp.sum(p, axis=-1, keepdims=True)
    acc_sc[...] = alpha * acc_sc[...] + jnp.dot(
        p.astype(v_ref.dtype), v_ref[...], preferred_element_type=jnp.float32)
    m_sc[...] = m_new

    @pl.when(ki == pl.num_programs(3) - 1)
    def _finalize():
        inv_l = pl.reciprocal(l_sc[...], approx=True)      # EUP, off the VALU path
        o_ref[...] = (acc_sc[...] * inv_l).astype(o_ref.dtype)


def _flash_attention(q_arr, q_off, k_arr, k_off, v_arr, v_off, mask,
                     *, num_heads, head_dim, kv_len):
    """q_arr: (B, Sq, *), k_arr/v_arr: (B, Skv, *): per-head D-wide column
    slices start at block offsets q_off/k_off/v_off (in units of D). The
    arrays may be the same fused projection output. Returns (B, Sq, H*D)."""
    B, S_pad, _ = q_arr.shape
    Skv_pad = k_arr.shape[1]
    D, H = head_dim, num_heads
    eb = jnp.dtype(q_arr.dtype).itemsize
    mshape = None if mask is None else mask.shape
    mbytes = 0 if mask is None else jnp.dtype(mask.dtype).itemsize

    def footprint(tq, tk):
        mb = 0
        if mshape is not None:
            mb = (tq if mshape[2] != 1 else 1) * (tk if mshape[3] != 1 else 1) * mbytes
        per = 2 * (2 * tq * D * eb + 2 * tk * D * eb + mb)   # q/o + k/v + mask, dbl-buf
        scratch = tq * D * 4 + 2 * tq * 4
        interm = 6 * tq * tk * 4                             # s/p/etc. temporaries
        return per + scratch + interm

    budget = 26 << 20
    tq, tk = 8, 8
    found = False
    for cq in (256, 128, 64, 32, 16, 8):
        if S_pad % cq:
            continue
        for ck in (512, 256, 128, 64, 32, 16, 8):
            if Skv_pad % ck:
                continue
            if footprint(cq, ck) <= budget:
                tq, tk = cq, ck
                found = True
                break
        if found:
            break
    vmem = int(footprint(tq, tk) + (4 << 20))

    grid = (B, H, S_pad // tq, Skv_pad // tk)
    kv_tail = (Skv_pad != kv_len)
    with_mask = mask is not None

    in_specs = [
        pl.BlockSpec((None, tq, D), lambda b, h, qi, ki: (b, qi, q_off + h)),
        pl.BlockSpec((None, tk, D), lambda b, h, qi, ki: (b, ki, k_off + h)),
        pl.BlockSpec((None, tk, D), lambda b, h, qi, ki: (b, ki, v_off + h)),
    ]
    args = [q_arr, k_arr, v_arr]
    if with_mask:
        mB, mH, mS, mK = mask.shape
        mq = tq if mS != 1 else 1
        mk = tk if mK != 1 else 1

        def mask_map(b, h, qi, ki):
            return (b if mB != 1 else 0, h if mH != 1 else 0,
                    qi if mS != 1 else 0, ki if mK != 1 else 0)

        in_specs.append(pl.BlockSpec((None, None, mq, mk), mask_map))
        args.append(mask)

    kernel = partial(_flash_attn_kernel, with_mask=with_mask,
                     kv_tail=kv_tail, kv_len=kv_len, tk=tk)
    return pl.pallas_call(
        kernel,
        out_shape=jax.ShapeDtypeStruct((B, S_pad, H * D), q_arr.dtype),
        grid=grid,
        in_specs=in_specs,
        out_specs=pl.BlockSpec((None, tq, D), lambda b, h, qi, ki: (b, qi, h)),
        scratch_shapes=[
            pltpu.VMEM((tq, 1), jnp.float32),   # running max m
            pltpu.VMEM((tq, 1), jnp.float32),   # running sum l
            pltpu.VMEM((tq, D), jnp.float32),   # output accumulator
        ],
        compiler_params=pltpu.CompilerParams(
            dimension_semantics=("parallel", "parallel", "parallel", "arbitrary"),
            vmem_limit_bytes=vmem),
    )(*args)


# ----------------------------------------------------------------------------
# Module forward
# ----------------------------------------------------------------------------
def multihead_attention(params, query, key=None, value=None, attention_mask=None,
                        *, num_heads: int):
    """Pallas forward matching MultiheadAttention.forward (return_attn_weights=False)."""
    if key is None:
        key = query
    if value is None:
        value = key
    self_attn = (key is query) and (value is query)
    kv_shared = (value is key)

    B, S, E = query.shape
    Skv, Cd = key.shape[1], key.shape[2]
    if E % num_heads != 0:
        raise ValueError(f"embed_dim {E} must be divisible by num_heads {num_heads}")
    D = E // num_heads
    if D % 128 != 0:
        # TODO(synk): support head_dim that is not a multiple of 128 (pad D / group heads).
        raise ValueError("This kernel requires head_dim to be a multiple of 128.")
    if value.shape[1] != Skv:
        raise ValueError("key and value must have the same sequence length")
    scaling = D ** (-0.5)
    in_dtype = query.dtype
    cdt = jnp.bfloat16        # MXU compute dtype (f32 accumulation everywhere)
    H = num_heads

    # PyTorch Linear weights are [out, in] -> use [in, out] so y = x @ W + b.
    # Fold the 1/sqrt(head_dim) scaling into the Q projection (free).
    wq = params['wq'].T * scaling
    bq = params['bq'] * scaling
    wk, bk = params['wk'].T, params['bk']
    wv, bv = params['wv'].T, params['bv']
    wo, bo = params['wo'].T, params['bo']

    # Pad sequence lengths up to a multiple of 128 (keeps every block on the
    # fast lane-dense path); padded keys are masked in-kernel, padded query
    # rows are sliced off at the end.
    S_pad = _round_up(S, 128)
    Skv_pad = _round_up(Skv, 128)

    if self_attn:
        # One fused QKV GEMM: the activation is read from HBM exactly once.
        w_qkv = jnp.concatenate([wq, wk, wv], axis=1).astype(cdt)
        b_qkv = jnp.concatenate([bq, bk, bv]).astype(jnp.float32)
        x = _pad_axis(query, 1, S_pad)
        qkv = _linear(x.reshape(B * S_pad, E), w_qkv, b_qkv, cdt)
        qkv = qkv.reshape(B, S_pad, 3 * E)
        q_arr = k_arr = v_arr = qkv
        q_off, k_off, v_off = 0, H, 2 * H
    else:
        xq = _pad_axis(query, 1, S_pad)
        q_arr = _linear(xq.reshape(B * S_pad, E), wq.astype(cdt),
                        bq.astype(jnp.float32), cdt).reshape(B, S_pad, E)
        q_off = 0
        xk = _pad_axis(key, 1, Skv_pad)
        if kv_shared:
            # Fused K/V GEMM: the shared context is read from HBM exactly once.
            w_kv = jnp.concatenate([wk, wv], axis=1).astype(cdt)
            b_kv = jnp.concatenate([bk, bv]).astype(jnp.float32)
            kv = _linear(xk.reshape(B * Skv_pad, Cd), w_kv, b_kv, cdt)
            kv = kv.reshape(B, Skv_pad, 2 * E)
            k_arr = v_arr = kv
            k_off, v_off = 0, H
        else:
            xv = _pad_axis(value, 1, Skv_pad)
            k_arr = _linear(xk.reshape(B * Skv_pad, Cd), wk.astype(cdt),
                            bk.astype(jnp.float32), cdt).reshape(B, Skv_pad, E)
            v_arr = _linear(xv.reshape(B * Skv_pad, Cd), wv.astype(cdt),
                            bv.astype(jnp.float32), cdt).reshape(B, Skv_pad, E)
            k_off = v_off = 0

    mask = attention_mask
    if mask is not None:
        if mask.ndim != 4:
            raise ValueError("attention_mask must be 4-D [B, H, S, Skv] (dims may be 1)")
        for dim, full in zip(mask.shape, (B, H, S, Skv)):
            if dim not in (1, full):
                raise ValueError("attention_mask dims must be 1 or the full extent")
        if mask.shape[2] != 1:
            mask = _pad_axis(mask, 2, S_pad)
        if mask.shape[3] != 1:
            mask = _pad_axis(mask, 3, Skv_pad)

    # attn_dropout: p = 0.0 -> identity
    ctx = _flash_attention(q_arr, q_off, k_arr, k_off, v_arr, v_off, mask,
                           num_heads=H, head_dim=D, kv_len=Skv)

    # ctx is already in merged (B, S_pad, H*D) layout -> plain output GEMM.
    out = _linear(ctx.reshape(B * S_pad, E), wo.astype(cdt),
                  bo.astype(jnp.float32), in_dtype).reshape(B, S_pad, E)
    # resid_dropout: p = 0.0 -> identity
    return out[:, :S, :]


# ----------------------------------------------------------------------------
# Deterministic parameter init (matches nn.init.xavier_uniform_ semantics)
# ----------------------------------------------------------------------------
def _xavier_uniform(rng, out_dim, in_dim, gain):
    bound = gain * math.sqrt(6.0 / (in_dim + out_dim))
    return jax.random.uniform(rng, (out_dim, in_dim), jnp.float32, -bound, bound)


def init_params(rng, embed_dim, context_dim):
    ks = jax.random.split(rng, 4)
    g = 1.0 / math.sqrt(2.0)
    return {
        'wq': _xavier_uniform(ks[0], embed_dim, embed_dim, g),
        'wk': _xavier_uniform(ks[1], embed_dim, context_dim, g),
        'wv': _xavier_uniform(ks[2], embed_dim, context_dim, g),
        'wo': _xavier_uniform(ks[3], embed_dim, embed_dim, 1.0),
        'bq': jnp.zeros((embed_dim,), jnp.float32),
        'bk': jnp.zeros((embed_dim,), jnp.float32),
        'bv': jnp.zeros((embed_dim,), jnp.float32),
        'bo': jnp.zeros((embed_dim,), jnp.float32),
    }


# ----------------------------------------------------------------------------
# Pure-JAX reference (mirrors the PyTorch forward) for a sanity check
# ----------------------------------------------------------------------------
def reference(params, query, key, value, attention_mask, num_heads):
    B, S, E = query.shape
    D = E // num_heads
    prec = jax.lax.Precision.HIGHEST
    q = jnp.einsum('bsi,oi->bso', query, params['wq'], precision=prec) + params['bq']
    k = jnp.einsum('bsi,oi->bso', key, params['wk'], precision=prec) + params['bk']
    v = jnp.einsum('bsi,oi->bso', value, params['wv'], precision=prec) + params['bv']
    q = q.reshape(B, -1, num_heads, D).transpose(0, 2, 1, 3)
    k = k.reshape(B, -1, num_heads, D).transpose(0, 2, 1, 3)
    v = v.reshape(B, -1, num_heads, D).transpose(0, 2, 1, 3)
    w = jnp.einsum('bhqd,bhkd->bhqk', q, k, precision=prec) * (D ** -0.5)
    if attention_mask is not None:
        w = w + attention_mask
    w = jax.nn.softmax(w, axis=-1)
    o = jnp.einsum('bhqk,bhkd->bhqd', w, v, precision=prec)
    o = o.transpose(0, 2, 1, 3).reshape(B, -1, E)
    return jnp.einsum('bsi,oi->bso', o, params['wo'], precision=prec) + params['bo']


def _check(name, out, ref):
    assert out.shape == ref.shape, (name, out.shape, ref.shape)
    err = float(jnp.max(jnp.abs(out.astype(jnp.float32) - ref)))
    assert jnp.allclose(out, ref, atol=2e-2, rtol=2e-2), (name, err)


if __name__ == "__main__":
    root = jax.random.PRNGKey(0)
    k_p1, k_p2, k_p3, k_q, k_kv, k_mask, k_q3, k_kv3, k_mask3 = jax.random.split(root, 9)

    B, S, E, H = 2, 128, 256, 2   # head_dim = 128 keeps every block lane-dense

    # --- Test 1: self-attention, no mask (fused QKV GEMM, no zeros mask) ---
    params = init_params(k_p1, E, E)
    query = jax.random.normal(k_q, (B, S, E), jnp.float32)
    out = jax.block_until_ready(multihead_attention(params, query, num_heads=H))
    ref = reference(params, query, query, query, None, H)
    _check("self-attn", out, ref)

    # --- Test 2: cross-attention + full additive mask (fused KV GEMM, tk=512) ---
    Skv, Cd = 512, 192
    params2 = init_params(k_p2, E, Cd)
    ctx_kv = jax.random.normal(k_kv, (B, Skv, Cd), jnp.float32)
    mask = jax.random.normal(k_mask, (B, H, S, Skv), jnp.float32)
    out2 = jax.block_until_ready(
        multihead_attention(params2, query, ctx_kv, ctx_kv, mask, num_heads=H))
    ref2 = reference(params2, query, ctx_kv, ctx_kv, mask, H)
    _check("cross-attn", out2, ref2)

    # --- Test 3: ragged lengths (padded to 128) + head/query-broadcast mask ---
    S3, Skv3 = 100, 200
    params3 = init_params(k_p3, E, Cd)
    query3 = jax.random.normal(k_q3, (B, S3, E), jnp.float32)
    ctx3 = jax.random.normal(k_kv3, (B, Skv3, Cd), jnp.float32)
    mask3 = jax.random.normal(k_mask3, (B, 1, 1, Skv3), jnp.float32)
    out3 = jax.block_until_ready(
        multihead_attention(params3, query3, ctx3, ctx3, mask3, num_heads=H))
    ref3 = reference(params3, query3, ctx3, ctx3, mask3, H)
    _check("ragged+broadcast-mask", out3, ref3)

    print("KERNEL_OK")
</pallas_src>

<mosaic_0001>
module attributes {stable_mosaic.version = 11 : i64} {
  func.func @_linear_kernel(%arg0: i32, %arg1: i32, %arg2: memref<256x256xf32, #tpu.memory_space<vmem>>, %arg3: memref<256x256xbf16, #tpu.memory_space<vmem>>, %arg4: memref<1x256xf32, #tpu.memory_space<vmem>>, %arg5: memref<256x256xbf16, #tpu.memory_space<vmem>>) attributes {dimension_semantics = [#tpu.dimension_semantics<parallel>, #tpu.dimension_semantics<parallel>], iteration_bounds = array<i64: 1, 3>, scalar_prefetch = 0 : i64, scratch_operands = 0 : i64, tpu.core_type = #tpu.core_type<tc>, window_params = [{transform_indices = @transform_0, window_bounds = array<i64: 256, 256>}, {transform_indices = @transform_1, window_bounds = array<i64: 256, 256>}, {transform_indices = @transform_2, window_bounds = array<i64: 1, 256>}, {transform_indices = @transform_3, window_bounds = array<i64: 256, 256>}]} {
    %c0 = arith.constant 0 : index
    %c0_0 = arith.constant 0 : index
    %0 = vector.load %arg2[%c0, %c0_0] : memref<256x256xf32, #tpu.memory_space<vmem>>, vector<256x256xf32>
    %1 = arith.truncf %0 : vector<256x256xf32> to vector<256x256xbf16>
    %c0_1 = arith.constant 0 : index
    %c0_2 = arith.constant 0 : index
    %2 = vector.load %arg3[%c0_1, %c0_2] : memref<256x256xbf16, #tpu.memory_space<vmem>>, vector<256x256xbf16>
    %cst = arith.constant dense<0.000000e+00> : vector<256x256xf32>
    %3 = tpu.matmul %1, %2, %cst {dimension_numbers = #tpu.dot_dimension_numbers<[1], [0], [0], [1], [0, 0, 1, 1], [], []>} : vector<256x256xbf16>, vector<256x256xbf16>, vector<256x256xf32> -> vector<256x256xf32>
    %c0_3 = arith.constant 0 : index
    %c0_4 = arith.constant 0 : index
    %4 = vector.load %arg4[%c0_3, %c0_4] : memref<1x256xf32, #tpu.memory_space<vmem>>, vector<1x256xf32>
    %5 = vector.broadcast %4 : vector<1x256xf32> to vector<256x256xf32>
    %6 = arith.addf %3, %5 : vector<256x256xf32>
    %7 = arith.truncf %6 : vector<256x256xf32> to vector<256x256xbf16>
    %c0_5 = arith.constant 0 : index
    %c0_6 = arith.constant 0 : index
    %8 = vector.load %arg5[%c0_5, %c0_6] : memref<256x256xbf16, #tpu.memory_space<vmem>>, vector<256x256xbf16>
    tpu.vector_store %arg5[%c0_5, %c0_6], %7 {strides = array<i32>} : memref<256x256xbf16, #tpu.memory_space<vmem>>, vector<256x256xbf16>,
    return
  }
  func.func @transform_0(%arg0: i32, %arg1: i32) -> (i32, i32) {
    %c0_i32 = arith.constant 0 : i32
    %c0_i32_0 = arith.constant 0 : i32
    return %arg0, %c0_i32 : i32, i32
  }
  func.func @transform_1(%arg0: i32, %arg1: i32) -> (i32, i32) {
    %c0_i32 = arith.constant 0 : i32
    %c0_i32_0 = arith.constant 0 : i32
    return %c0_i32, %arg1 : i32, i32
  }
  func.func @transform_2(%arg0: i32, %arg1: i32) -> (i32, i32) {
    %c0_i32 = arith.constant 0 : i32
    %c0_i32_0 = arith.constant 0 : i32
    return %c0_i32, %arg1 : i32, i32
  }
  func.func @transform_3(%arg0: i32, %arg1: i32) -> (i32, i32) {
    %c0_i32 = arith.constant 0 : i32
    return %arg0, %arg1 : i32, i32
  }
}

</mosaic_0001>

<llo_original>
// kernel: tpu_custom_call.1
$region0: #{tpu_custom_call.1}
  #allocation0 [shape = 'u32[]', space=smem, size = 0x4, offset = 0x4, fixed_abs, tag = 'smem constant byte address 0x4 - core index']
  #allocation1 [shape = 'u32[144,128]{1,0:T(1,128)}', space=vmem, size = 0x12000, scoped, tag = 'internal scratch']
  %s0 = inlined_call_operand.hbm [shape: f32[256,256], index: 0, kind: input, shape index: {}]
  %s1 = inlined_call_operand.hbm [shape: bf16[256,768], index: 1, kind: input, shape index: {}]
  %s2 = inlined_call_operand.vmem [shape: f32[1,768], index: 2, kind: input, shape index: {}]
  %s3 = inlined_call_operand.hbm [shape: bf16[256,768], index: 3, kind: output, shape index: {}]
  %s4 = sld [smem:[#allocation0]]
  $region53: #{tpu_custom_call.1} parent=0
    _
  %s6 = ssub.s32 1, %s4
  %s7 = scalar_select 0, %s6, %s4
  $region1: #{tpu_custom_call.1} parent=0
    #allocation2 [shape = 'u8[262144]{0}', space=vmem, size = 0x40000, scoped, tag = 'input window, operand 0, single buffered']
    #allocation3 [shape = 's32[2]{0}', space=sflag, size = 0x8, scoped, tag = 'scoped memory for tpu_custom_call.1']
    #allocation4 [shape = 's32[2]{0}', space=sflag, size = 0x8, scoped, tag = 'scoped memory for tpu_custom_call.1']
    #allocation5 [shape = 'u8[262144]{0}', space=vmem, size = 0x40000, scoped, tag = 'input window, operand 1']
    #allocation6 [shape = 's32[2]{0}', space=sflag, size = 0x8, scoped, tag = 'scoped memory for tpu_custom_call.1']
    #allocation7 [shape = 'u8[262144]{0}', space=vmem, size = 0x40000, scoped, tag = 'output window, operand 0']
    %8 = vsyncpa [#allocation3], 0
    %9 = vsyncpa [#allocation6], 0
    %s10 = scalar_lea.sflag [#allocation6], 1
    %11 = vsyncpa %s10, 0
    %12 = vsyncpa [#allocation4], 0
    %s13 = scalar_lea.sflag [#allocation4], 1
    %14 = vsyncpa %s13, 0
    loop: start=0, step=1, limit=5
    $region2: #{tpu_custom_call.1} parent=1 // loop_pre_header
      _
    $region3: #{tpu_custom_call.1} parent=1 // loop_header
      %s16 = sphi 0, %s20
      %p17 = scmp.ge.s32.totalorder %s16, 5
      %s23 = sphi 0, %s35
      %s24 = sphi 0, %s31
      %s25 = sphi 0, %s23
      %s26 = sphi 0, %s24
      %s27 = sphi 0, %s25
      %s28 = sphi 0, %s26
      %s38 = sphi 0, %s40
      %s41 = sphi 0, %s38
      %s42 = sphi 0, %s41
      %s58 = sphi 0, %s42
      %s64 = sphi 0, %s66
      %s67 = sphi 0, %s64
      %s68 = sphi 0, %s67
      %s84 = sphi 0, %s68
      %s90 = sphi 0, %s92
      %s93 = sphi 0, %s90
      %s94 = sphi 0, %s93
      %s110 = sphi 0, %s94
      %s118 = sphi 0, %s120
      %s121 = sphi 0, %s118
      %s122 = sphi 0, %s121
      %s138 = sphi 0, %s122
    $region4: #{tpu_custom_call.1} parent=1 // loop_header_branch
      %19 = sbr.rel (%p17) target = $region8
    $region5: #{tpu_custom_call.1} parent=1 // loop_body
      %s21 = ssub.s32 %s16, 1
      %s22 = ssub.s32 %s16, 2
      %s29 = sadd.s32 1, %s24
      %p30 = scmp.ge.s32.totalorder %s29, 3
      %s31 = scalar_select %p30, 0, %s29
      %s32 = sadd.s32 1, %s23
      %s33 = scalar_select %p30, %s32, %s23
      %p34 = scmp.ge.s32.totalorder %s33, 1
      %s35 = scalar_select %p34, 0, %s33
      %s36 = ssub.s32 %s23, %s35
      %p37 = scmp.eq.s32.totalorder %s36, 0
      %s39 = sadd.s32 %s38, 1
      %s40 = scalar_select %p37, %s38, %s39
      %p43 = pneg %p37
      %p44 = scmp.eq.s32.totalorder %s16, 2
      %p45 = por %p43, %p44
      %p46 = scmp.ne.s32.totalorder %s38, %s41
      %p47 = scmp.eq.s32.totalorder %s16, 0
      %p48 = por %p46, %p47
      %p49 = scmp.ne.s32.totalorder %s38, %s41
      %p50 = scmp.eq.s32.totalorder %s21, 2
      %p51 = por %p49, %p50
      %p52 = scmp.ne.s32.totalorder %s41, %s42
      %p53 = scmp.eq.s32.totalorder %s21, 0
      %p54 = por %p52, %p53
      %p55 = scmp.ne.s32.totalorder %s41, %s42
      %p56 = scmp.eq.s32.totalorder %s22, 2
      %p57 = por %p55, %p56
      %p59 = scmp.ne.s32.totalorder %s42, %s58
      %p60 = scmp.eq.s32.totalorder %s22, 0
      %p61 = por %p59, %p60
      %s62 = ssub.s32 %s24, %s31
      %p63 = scmp.eq.s32.totalorder %s62, 0
      %s65 = sadd.s32 %s64, 1
      %s66 = scalar_select %p63, %s64, %s65
      %p69 = pneg %p63
      %p70 = scmp.eq.s32.totalorder %s16, 2
      %p71 = por %p69, %p70
      %p72 = scmp.ne.s32.totalorder %s64, %s67
      %p73 = scmp.eq.s32.totalorder %s16, 0
      %p74 = por %p72, %p73
      %p75 = scmp.ne.s32.totalorder %s64, %s67
      %p76 = scmp.eq.s32.totalorder %s21, 2
      %p77 = por %p75, %p76
      %p78 = scmp.ne.s32.totalorder %s67, %s68
      %p79 = scmp.eq.s32.totalorder %s21, 0
      %p80 = por %p78, %p79
      %p81 = scmp.ne.s32.totalorder %s67, %s68
      %p82 = scmp.eq.s32.totalorder %s22, 2
      %p83 = por %p81, %p82
      %p85 = scmp.ne.s32.totalorder %s68, %s84
      %p86 = scmp.eq.s32.totalorder %s22, 0
      %p87 = por %p85, %p86
      %s88 = ssub.s32 %s24, %s31
      %p89 = scmp.eq.s32.totalorder %s88, 0
      %s91 = sadd.s32 %s90, 1
      %s92 = scalar_select %p89, %s90, %s91
      %p95 = pneg %p89
      %p96 = scmp.eq.s32.totalorder %s16, 2
      %p97 = por %p95, %p96
      %p98 = scmp.ne.s32.totalorder %s90, %s93
      %p99 = scmp.eq.s32.totalorder %s16, 0
      %p100 = por %p98, %p99
      %p101 = scmp.ne.s32.totalorder %s90, %s93
      %p102 = scmp.eq.s32.totalorder %s21, 2
      %p103 = por %p101, %p102
      %p104 = scmp.ne.s32.totalorder %s93, %s94
      %p105 = scmp.eq.s32.totalorder %s21, 0
      %p106 = por %p104, %p105
      %p107 = scmp.ne.s32.totalorder %s93, %s94
      %p108 = scmp.eq.s32.totalorder %s22, 2
      %p109 = por %p107, %p108
      %p111 = scmp.ne.s32.totalorder %s94, %s110
      %p112 = scmp.eq.s32.totalorder %s22, 0
      %p113 = por %p111, %p112
      %s114 = ssub.s32 %s23, %s35
      %s115 = ssub.s32 %s24, %s31
      %s116 = sor.u32 %s114, %s115
      %p117 = scmp.eq.s32.totalorder %s116, 0
      %s119 = sadd.s32 %s118, 1
      %s120 = scalar_select %p117, %s118, %s119
      %p123 = pneg %p117
      %p124 = scmp.eq.s32.totalorder %s16, 2
      %p125 = por %p123, %p124
      %p126 = scmp.ne.s32.totalorder %s118, %s121
      %p127 = scmp.eq.s32.totalorder %s16, 0
      %p128 = por %p126, %p127
      %p129 = scmp.ne.s32.totalorder %s118, %s121
      %p130 = scmp.eq.s32.totalorder %s21, 2
      %p131 = por %p129, %p130
      %p132 = scmp.ne.s32.totalorder %s121, %s122
      %p133 = scmp.eq.s32.totalorder %s21, 0
      %p134 = por %p132, %p133
      %p135 = scmp.ne.s32.totalorder %s121, %s122
      %p136 = scmp.eq.s32.totalorder %s22, 2
      %p137 = por %p135, %p136
      %p139 = scmp.ne.s32.totalorder %s122, %s138
      %p140 = scmp.eq.s32.totalorder %s22, 0
      %p141 = por %p139, %p140
      %p142 = scmp.le.s32.totalorder 1, %s16
      %p143 = scmp.lt.s32.totalorder %s16, 4
      %p144 = pnand %p142, %p143
      %p145 = pneg %p144
      // Predicated region
      $region9: #{tpu_custom_call.1} parent=5 // pred_check
        _
      $region10: #{tpu_custom_call.1} parent=5 // pred_check_branch
        %147 = sbr.rel (%p144) target = $region12
      $region11: #{tpu_custom_call.1} parent=5 // pred_region
        %s148 = ssub.s32 %s16, 1
        // Predicated region
        $region13: #{tpu_custom_call.1} parent=11 // pred_check
          %p149 = pneg %p54
        $region14: #{tpu_custom_call.1} parent=11 // pred_check_branch
          %151 = sbr.rel (%p149) target = $region16
        $region15: #{tpu_custom_call.1} parent=11 // pred_region
          %s152 = smul.u32 32, %s25
          %s154 = ssub.s32 8192, 8192
          %155 = vsyncadd [#allocation3], %s154
          %s156 = smul.addr %s152, 2
          %s157 = smul.addr %s156, 128
          %s158 = scalar_lea.hbm %s0, %s157
          %s159 = sshll.u32 [#allocation2], 4
          %s160 = int_to_ptr.vmem [resolvable:$true] %s159
          %165 = dma.hbm_to_vmem [thread:$0]  %s158, 8192, %s160, [#allocation3], 256, 256, 16
        $region16: #{tpu_custom_call.1} parent=11 // pred_fallthru
          _
      $region12: #{tpu_custom_call.1} parent=5 // pred_fallthru
        _
      %p166 = scmp.lt.s32.totalorder %s16, 3
      // Predicated region
      $region17: #{tpu_custom_call.1} parent=5 // pred_check
        %p167 = pneg %p166
      $region18: #{tpu_custom_call.1} parent=5 // pred_check_branch
        %169 = sbr.rel (%p167) target = $region20
      $region19: #{tpu_custom_call.1} parent=5 // pred_region
        // Predicated region
        $region21: #{tpu_custom_call.1} parent=19 // pred_check
          %p170 = pneg %p74
        $region22: #{tpu_custom_call.1} parent=19 // pred_check_branch
          %172 = sbr.rel (%p170) target = $region24
        $region23: #{tpu_custom_call.1} parent=19 // pred_region
          %s173 = sand.u32 %s64, 1
          %s174 = scalar_lea.sflag [#allocation6], %s173
          %s175 = sand.u32 %s64, 1
          %s176 = smul.addr %s175, 256
          %s177 = scalar_lea.vmem [#allocation5], %s176
          %s178 = smul.u32 2, %s24
          %s180 = ssub.s32 4096, 4096
          %181 = vsyncadd %s174, %s180
          %s182 = smul.addr %s178, 64
          %s183 = scalar_lea.hbm %s1, %s182
          %s184 = sshll.u32 %s177, 4
          %s185 = int_to_ptr.vmem [resolvable:$true] %s184
          %190 = dma.hbm_to_vmem [thread:$0]  %s183, 4096, %s185, %s174, 384, 128, 8
        $region24: #{tpu_custom_call.1} parent=19 // pred_fallthru
          _
        // Predicated region
        $region25: #{tpu_custom_call.1} parent=19 // pred_check
          %p191 = pneg %p100
        $region26: #{tpu_custom_call.1} parent=19 // pred_check_branch
          %193 = sbr.rel (%p191) target = $region28
        $region27: #{tpu_custom_call.1} parent=19 // pred_region
          %s194 = smul.u32 2, %s24
          %p195 = scmp.lt.s32.totalorder %s194, 5
          %s196 = scalar_select %p195, %s194, 5
          %s197 = scalar_lea.vmem %s2, %s196
          %s198 = smul.u32 2, %s24
        $region28: #{tpu_custom_call.1} parent=19 // pred_fallthru
          _
      $region20: #{tpu_custom_call.1} parent=5 // pred_fallthru
        _
      %p199 = scmp.le.s32.totalorder 1, %s16
      %p200 = scmp.lt.s32.totalorder %s16, 4
      %p201 = pnand %p199, %p200
      %p202 = pneg %p201
      // Predicated region
      $region29: #{tpu_custom_call.1} parent=5 // pred_check
        _
      $region30: #{tpu_custom_call.1} parent=5 // pred_check_branch
        %204 = sbr.rel (%p201) target = $region32
      $region31: #{tpu_custom_call.1} parent=5 // pred_region
        %s205 = ssub.s32 %s16, 1
        // Predicated region
        $region33: #{tpu_custom_call.1} parent=31 // pred_check
          %p206 = pneg %p54
        $region34: #{tpu_custom_call.1} parent=31 // pred_check_branch
          %208 = sbr.rel (%p206) target = $region36
        $region35: #{tpu_custom_call.1} parent=31 // pred_region
          %209 = dma.done [#allocation3], 8192
        $region36: #{tpu_custom_call.1} parent=31 // pred_fallthru
          _
        %s210 = sand.u32 %s67, 1
        %s211 = scalar_lea.sflag [#allocation6], %s210
        %s212 = sand.u32 %s67, 1
        %s213 = smul.addr %s212, 256
        %s214 = scalar_lea.vmem [#allocation5], %s213
        // Predicated region
        $region37: #{tpu_custom_call.1} parent=31 // pred_check
          %p215 = pneg %p80
        $region38: #{tpu_custom_call.1} parent=31 // pred_check_branch
          %217 = sbr.rel (%p215) target = $region40
        $region39: #{tpu_custom_call.1} parent=31 // pred_region
          %218 = dma.done %s211, 4096
        $region40: #{tpu_custom_call.1} parent=31 // pred_fallthru
          _
        %p219 = pneg %p54
        %p220 = pneg %p51
        %s221 = sand.u32 %s67, 1
        %s222 = scalar_lea.sflag [#allocation6], %s221
        %s223 = sand.u32 %s67, 1
        %s224 = smul.addr %s223, 256
        %s225 = scalar_lea.vmem [#allocation5], %s224
        %p226 = pneg %p80
        %p227 = pneg %p77
        %s228 = smul.u32 2, %s26
        %p229 = scmp.lt.s32.totalorder %s228, 5
        %s230 = scalar_select %p229, %s228, 5
        %s231 = scalar_lea.vmem %s2, %s230
        %p232 = pneg %p106
        %p233 = pneg %p103
        %p234 = pneg %p134
        %p235 = pneg %p131
        %s236 = sand.u32 %s121, 1
        %s237 = scalar_lea.sflag [#allocation4], %s236
        %s238 = sand.u32 %s121, 1
        %s239 = smul.addr %s238, 256
        %s240 = scalar_lea.vmem [#allocation7], %s239
        %s241 = smul.u32 32, %s25
        %s242 = smul.u32 2, %s26
        %s243 = smul.u32 2, %s26
        %p244 = scmp.lt.s32.totalorder %s243, 5
        %s245 = scalar_select %p244, %s243, 5
        %s246 = scalar_lea.vmem %s2, %s245
        %s247 = smul.u32 2, %s26
        %s248 = smul.u32 32, %s25
        %s249 = smul.u32 2, %s26
        %v250 = vld [vmem:[#allocation2] sm:$0xff]
        %v251 = vld [vmem:[#allocation2 + $0x8] sm:$0xff]
        %v252 = vld [vmem:[#allocation2 + $0x10] sm:$0xff]
        %v253 = vld [vmem:[#allocation2 + $0x18] sm:$0xff]
        %v254 = vld [vmem:[#allocation2 + $0x20] sm:$0xff]
        %v255 = vld [vmem:[#allocation2 + $0x28] sm:$0xff]
        %v256 = vld [vmem:[#allocation2 + $0x30] sm:$0xff]
        %v257 = vld [vmem:[#allocation2 + $0x38] sm:$0xff]
        %v258 = vld [vmem:[#allocation2 + $0x40] sm:$0xff]
        %v259 = vld [vmem:[#allocation2 + $0x48] sm:$0xff]
        %v260 = vld [vmem:[#allocation2 + $0x50] sm:$0xff]
        %v261 = vld [vmem:[#allocation2 + $0x58] sm:$0xff]
        %v262 = vld [vmem:[#allocation2 + $0x60] sm:$0xff]
        %v263 = vld [vmem:[#allocation2 + $0x68] sm:$0xff]
        %v264 = vld [vmem:[#allocation2 + $0x70] sm:$0xff]
        %v265 = vld [vmem:[#allocation2 + $0x78] sm:$0xff]
        %v266 = vld [vmem:[#allocation2 + $0x80] sm:$0xff]
        %v267 = vld [vmem:[#allocation2 + $0x88] sm:$0xff]
        %v268 = vld [vmem:[#allocation2 + $0x90] sm:$0xff]
        %v269 = vld [vmem:[#allocation2 + $0x98] sm:$0xff]
        %v270 = vld [vmem:[#allocation2 + $0xa0] sm:$0xff]
        %v271 = vld [vmem:[#allocation2 + $0xa8] sm:$0xff]
        %v272 = vld [vmem:[#allocation2 + $0xb0] sm:$0xff]
        %v273 = vld [vmem:[#allocation2 + $0xb8] sm:$0xff]
        %v274 = vld [vmem:[#allocation2 + $0xc0] sm:$0xff]
        %v275 = vld [vmem:[#allocation2 + $0xc8] sm:$0xff]
        %v276 = vld [vmem:[#allocation2 + $0xd0] sm:$0xff]
        %v277 = vld [vmem:[#allocation2 + $0xd8] sm:$0xff]
        %v278 = vld [vmem:[#allocation2 + $0xe0] sm:$0xff]
        %v279 = vld [vmem:[#allocation2 + $0xe8] sm:$0xff]
        %v280 = vld [vmem:[#allocation2 + $0xf0] sm:$0xff]
        %v281 = vld [vmem:[#allocation2 + $0xf8] sm:$0xff]
        %v282 = vld [vmem:[#allocation2 + $0x100] sm:$0xff]
        %v283 = vld [vmem:[#allocation2 + $0x108] sm:$0xff]
        %v284 = vld [vmem:[#allocation2 + $0x110] sm:$0xff]
        %v285 = vld [vmem:[#allocation2 + $0x118] sm:$0xff]
        %v286 = vld [vmem:[#allocation2 + $0x120] sm:$0xff]
        %v287 = vld [vmem:[#allocation2 + $0x128] sm:$0xff]
        %v288 = vld [vmem:[#allocation2 + $0x130] sm:$0xff]
        %v289 = vld [vmem:[#allocation2 + $0x138] sm:$0xff]
        %v290 = vld [vmem:[#allocation2 + $0x140] sm:$0xff]
        %v291 = vld [vmem:[#allocation2 + $0x148] sm:$0xff]
        %v292 = vld [vmem:[#allocation2 + $0x150] sm:$0xff]
        %v293 = vld [vmem:[#allocation2 + $0x158] sm:$0xff]
        %v294 = vld [vmem:[#allocation2 + $0x160] sm:$0xff]
        %v295 = vld [vmem:[#allocation2 + $0x168] sm:$0xff]
        %v296 = vld [vmem:[#allocation2 + $0x170] sm:$0xff]
        %v297 = vld [vmem:[#allocation2 + $0x178] sm:$0xff]
        %v298 = vld [vmem:[#allocation2 + $0x180] sm:$0xff]
        %v299 = vld [vmem:[#allocation2 + $0x188] sm:$0xff]
        %v300 = vld [vmem:[#allocation2 + $0x190] sm:$0xff]
        %v301 = vld [vmem:[#allocation2 + $0x198] sm:$0xff]
        %v302 = vld [vmem:[#allocation2 + $0x1a0] sm:$0xff]
        %v303 = vld [vmem:[#allocation2 + $0x1a8] sm:$0xff]
        %v304 = vld [vmem:[#allocation2 + $0x1b0] sm:$0xff]
        %v305 = vld [vmem:[#allocation2 + $0x1b8] sm:$0xff]
        %v306 = vld [vmem:[#allocation2 + $0x1c0] sm:$0xff]
        %v307 = vld [vmem:[#allocation2 + $0x1c8] sm:$0xff]
        %v308 = vld [vmem:[#allocation2 + $0x1d0] sm:$0xff]
        %v309 = vld [vmem:[#allocation2 + $0x1d8] sm:$0xff]
        %v310 = vld [vmem:[#allocation2 + $0x1e0] sm:$0xff]
        %v311 = vld [vmem:[#allocation2 + $0x1e8] sm:$0xff]
        %v312 = vld [vmem:[#allocation2 + $0x1f0] sm:$0xff]
        %v313 = vld [vmem:[#allocation2 + $0x1f8] sm:$0xff]
        %v314 = vpack.c.bf16 %v252, %v250
        %v315 = vpack.c.bf16 %v253, %v251
        %v316 = vpack.c.bf16 %v256, %v254
        %v317 = vpack.c.bf16 %v257, %v255
        %v318 = vpack.c.bf16 %v260, %v258
        %v319 = vpack.c.bf16 %v261, %v259
        %v320 = vpack.c.bf16 %v264, %v262
        %v321 = vpack.c.bf16 %v265, %v263
        %v322 = vpack.c.bf16 %v268, %v266
        %v323 = vpack.c.bf16 %v269, %v267
        %v324 = vpack.c.bf16 %v272, %v270
        %v325 = vpack.c.bf16 %v273, %v271
        %v326 = vpack.c.bf16 %v276, %v274
        %v327 = vpack.c.bf16 %v277, %v275
        %v328 = vpack.c.bf16 %v280, %v278
        %v329 = vpack.c.bf16 %v281, %v279
        %v330 = vpack.c.bf16 %v284, %v282
        %v331 = vpack.c.bf16 %v285, %v283
        %v332 = vpack.c.bf16 %v288, %v286
        %v333 = vpack.c.bf16 %v289, %v287
        %v334 = vpack.c.bf16 %v292, %v290
        %v335 = vpack.c.bf16 %v293, %v291
        %v336 = vpack.c.bf16 %v296, %v294
        %v337 = vpack.c.bf16 %v297, %v295
        %v338 = vpack.c.bf16 %v300, %v298
        %v339 = vpack.c.bf16 %v301, %v299
        %v340 = vpack.c.bf16 %v304, %v302
        %v341 = vpack.c.bf16 %v305, %v303
        %v342 = vpack.c.bf16 %v308, %v306
        %v343 = vpack.c.bf16 %v309, %v307
        %v344 = vpack.c.bf16 %v312, %v310
        %v345 = vpack.c.bf16 %v313, %v311
        %v346 = vld [vmem:[%s214] sm:$0xff]
        %v347 = vld [vmem:[%s214 + $0x8] sm:$0xff]
        %v348 = vld [vmem:[%s214 + $0x10] sm:$0xff]
        %v349 = vld [vmem:[%s214 + $0x18] sm:$0xff]
        %v350 = vld [vmem:[%s214 + $0x20] sm:$0xff]
        %v351 = vld [vmem:[%s214 + $0x28] sm:$0xff]
        %v352 = vld [vmem:[%s214 + $0x30] sm:$0xff]
        %v353 = vld [vmem:[%s214 + $0x38] sm:$0xff]
        %v354 = vld [vmem:[%s214 + $0x40] sm:$0xff]
        %v355 = vld [vmem:[%s214 + $0x48] sm:$0xff]
        %v356 = vld [vmem:[%s214 + $0x50] sm:$0xff]
        %v357 = vld [vmem:[%s214 + $0x58] sm:$0xff]
        %v358 = vld [vmem:[%s214 + $0x60] sm:$0xff]
        %v359 = vld [vmem:[%s214 + $0x68] sm:$0xff]
        %v360 = vld [vmem:[%s214 + $0x70] sm:$0xff]
        %v361 = vld [vmem:[%s214 + $0x78] sm:$0xff]
        %v362 = vld [vmem:[%s214 + $0x80] sm:$0xff]
        %v363 = vld [vmem:[%s214 + $0x88] sm:$0xff]
        %v364 = vld [vmem:[%s214 + $0x90] sm:$0xff]
        %v365 = vld [vmem:[%s214 + $0x98] sm:$0xff]
        %v366 = vld [vmem:[%s214 + $0xa0] sm:$0xff]
        %v367 = vld [vmem:[%s214 + $0xa8] sm:$0xff]
        %v368 = vld [vmem:[%s214 + $0xb0] sm:$0xff]
        %v369 = vld [vmem:[%s214 + $0xb8] sm:$0xff]
        %v370 = vld [vmem:[%s214 + $0xc0] sm:$0xff]
        %v371 = vld [vmem:[%s214 + $0xc8] sm:$0xff]
        %v372 = vld [vmem:[%s214 + $0xd0] sm:$0xff]
        %v373 = vld [vmem:[%s214 + $0xd8] sm:$0xff]
        %v374 = vld [vmem:[%s214 + $0xe0] sm:$0xff]
        %v375 = vld [vmem:[%s214 + $0xe8] sm:$0xff]
        %v376 = vld [vmem:[%s214 + $0xf0] sm:$0xff]
        %v377 = vld [vmem:[%s214 + $0xf8] sm:$0xff]
        %v378 = vld [vmem:[%s246] sm:$0x3]
        %v380 = vlaneseq
        %v381 = vshrl.u32 %v380, 7
        %v382 = vsub.s32 0, %v381
        %v383 = vrot.slane %v378, %v382
        %v384 = vlaneseq
        %v385 = vshrl.u32 %v384, 7
        %v386 = vsub.s32 1, %v385
        %v387 = vrot.slane %v378, %v386
        %v422 = vunpack.c.l.b16 %v346
        %v423 = vunpack.c.h.b16 %v346
        %v424 = vunpack.c.l.b16 %v347
        %v425 = vunpack.c.h.b16 %v347
        %v426 = vunpack.c.l.b16 %v348
        %v427 = vunpack.c.h.b16 %v348
        %v428 = vunpack.c.l.b16 %v349
        %v429 = vunpack.c.h.b16 %v349
        %v430 = vunpack.c.l.b16 %v350
        %v431 = vunpack.c.h.b16 %v350
        %v432 = vunpack.c.l.b16 %v351
        %v433 = vunpack.c.h.b16 %v351
        %v434 = vunpack.c.l.b16 %v352
        %v435 = vunpack.c.h.b16 %v352
        %v436 = vunpack.c.l.b16 %v353
        %v437 = vunpack.c.h.b16 %v353
        %v438 = vunpack.c.l.b16 %v354
        %v439 = vunpack.c.h.b16 %v354
        %v440 = vunpack.c.l.b16 %v355
        %v441 = vunpack.c.h.b16 %v355
        %v442 = vunpack.c.l.b16 %v356
        %v443 = vunpack.c.h.b16 %v356
        %v444 = vunpack.c.l.b16 %v357
        %v445 = vunpack.c.h.b16 %v357
        %v446 = vunpack.c.l.b16 %v358
        %v447 = vunpack.c.h.b16 %v358
        %v448 = vunpack.c.l.b16 %v359
        %v449 = vunpack.c.h.b16 %v359
        %v450 = vunpack.c.l.b16 %v360
        %v451 = vunpack.c.h.b16 %v360
        %v452 = vunpack.c.l.b16 %v361
        %v453 = vunpack.c.h.b16 %v361
        %v454 = vunpack.c.l.b16 %v362
        %v455 = vunpack.c.h.b16 %v362
        %v456 = vunpack.c.l.b16 %v363
        %v457 = vunpack.c.h.b16 %v363
        %v458 = vunpack.c.l.b16 %v364
        %v459 = vunpack.c.h.b16 %v364
        %v460 = vunpack.c.l.b16 %v365
        %v461 = vunpack.c.h.b16 %v365
        %v462 = vunpack.c.l.b16 %v366
        %v463 = vunpack.c.h.b16 %v366
        %v464 = vunpack.c.l.b16 %v367
        %v465 = vunpack.c.h.b16 %v367
        %v466 = vunpack.c.l.b16 %v368
        %v467 = vunpack.c.h.b16 %v368
        %v468 = vunpack.c.l.b16 %v369
        %v469 = vunpack.c.h.b16 %v369
        %v470 = vunpack.c.l.b16 %v370
        %v471 = vunpack.c.h.b16 %v370
        %v472 = vunpack.c.l.b16 %v371
        %v473 = vunpack.c.h.b16 %v371
        %v474 = vunpack.c.l.b16 %v372
        %v475 = vunpack.c.h.b16 %v372
        %v476 = vunpack.c.l.b16 %v373
        %v477 = vunpack.c.h.b16 %v373
        %v478 = vunpack.c.l.b16 %v374
        %v479 = vunpack.c.h.b16 %v374
        %v480 = vunpack.c.l.b16 %v375
        %v481 = vunpack.c.h.b16 %v375
        %v482 = vunpack.c.l.b16 %v376
        %v483 = vunpack.c.h.b16 %v376
        %v484 = vunpack.c.l.b16 %v377
        %v485 = vunpack.c.h.b16 %v377
        %v486 = vpack.c.b16 %v424, %v422
        %v487 = vpack.c.b16 %v425, %v423
        %v488 = vpack.c.b16 %v428, %v426
        %v489 = vpack.c.b16 %v429, %v427
        %v490 = vpack.c.b16 %v432, %v430
        %v491 = vpack.c.b16 %v433, %v431
        %v492 = vpack.c.b16 %v436, %v434
        %v493 = vpack.c.b16 %v437, %v435
        %v494 = vpack.c.b16 %v440, %v438
        %v495 = vpack.c.b16 %v441, %v439
        %v496 = vpack.c.b16 %v444, %v442
        %v497 = vpack.c.b16 %v445, %v443
        %v498 = vpack.c.b16 %v448, %v446
        %v499 = vpack.c.b16 %v449, %v447
        %v500 = vpack.c.b16 %v452, %v450
        %v501 = vpack.c.b16 %v453, %v451
        %v502 = vpack.c.b16 %v456, %v454
        %v503 = vpack.c.b16 %v457, %v455
        %v504 = vpack.c.b16 %v460, %v458
        %v505 = vpack.c.b16 %v461, %v459
        %v506 = vpack.c.b16 %v464, %v462
        %v507 = vpack.c.b16 %v465, %v463
        %v508 = vpack.c.b16 %v468, %v466
        %v509 = vpack.c.b16 %v469, %v467
        %v510 = vpack.c.b16 %v472, %v470
        %v511 = vpack.c.b16 %v473, %v471
        %v512 = vpack.c.b16 %v476, %v474
        %v513 = vpack.c.b16 %v477, %v475
        %v514 = vpack.c.b16 %v480, %v478
        %v515 = vpack.c.b16 %v481, %v479
        %v516 = vpack.c.b16 %v484, %v482
        %v517 = vpack.c.b16 %v485, %v483
        %550 = vmatprep.subr.bf16.mxu0 %v487
        %551 = vmatpush1.bf16.msra.mxu0 %v486
        %552 = vmatprep.subr.bf16.mxu0 %v489
        %553 = vmatpush1.bf16.msra.mxu0 %v488
        %554 = vmatprep.subr.bf16.mxu0 %v491
        %555 = vmatpush1.bf16.msra.mxu0 %v490
        %556 = vmatprep.subr.bf16.mxu0 %v493
        %557 = vmatpush1.bf16.msra.mxu0 %v492
        %558 = vmatprep.subr.bf16.mxu0 %v495
        %559 = vmatpush1.bf16.msra.mxu0 %v494
        %560 = vmatprep.subr.bf16.mxu0 %v497
        %561 = vmatpush1.bf16.msra.mxu0 %v496
        %562 = vmatprep.subr.bf16.mxu0 %v499
        %563 = vmatpush1.bf16.msra.mxu0 %v498
        %564 = vmatprep.subr.bf16.mxu0 %v501
        %565 = vmatpush1.bf16.msra.mxu0 %v500
        %566 = vmatprep.subr.bf16.mxu0 %v503
        %567 = vmatpush1.bf16.msra.mxu0 %v502
        %568 = vmatprep.subr.bf16.mxu0 %v505
        %569 = vmatpush1.bf16.msra.mxu0 %v504
        %570 = vmatprep.subr.bf16.mxu0 %v507
        %571 = vmatpush1.bf16.msra.mxu0 %v506
        %572 = vmatprep.subr.bf16.mxu0 %v509
        %573 = vmatpush1.bf16.msra.mxu0 %v508
        %574 = vmatprep.subr.bf16.mxu0 %v511
        %575 = vmatpush1.bf16.msra.mxu0 %v510
        %576 = vmatprep.subr.bf16.mxu0 %v513
        %577 = vmatpush1.bf16.msra.mxu0 %v512
        %578 = vmatprep.subr.bf16.mxu0 %v515
        %579 = vmatpush1.bf16.msra.mxu0 %v514
        %580 = vmatprep.subr.bf16.mxu0 %v517
        %581 = vmatpush1.bf16.msra.mxu0 %v516
        %582 = vmatprep.mubr.bf16.mxu0 %v315
        %583 = vmatmul.mubr.bf16.gmra.mrb[0].mxu0 %v314
        %v584 = vpop.f32.mrb[0].mxu0
        %v585 = vadd.f32 %v383, %v584
        %v586 = vpop.f32.mrb[0].mxu0
        %v587 = vadd.f32 %v387, %v586
        %v588 = vpop.f32.mrb[0].mxu0
        %v589 = vadd.f32 %v383, %v588
        %v590 = vpop.f32.mrb[0].mxu0
        %v591 = vadd.f32 %v387, %v590
        %592 = vmatprep.mubr.bf16.mxu0 %v317
        %593 = vmatmul.mubr.bf16.gmra.mrb[0].mxu0 %v316
        %v594 = vpop.f32.mrb[0].mxu0
        %v595 = vadd.f32 %v383, %v594
        %v596 = vpop.f32.mrb[0].mxu0
        %v597 = vadd.f32 %v387, %v596
        %v598 = vpop.f32.mrb[0].mxu0
        %v599 = vadd.f32 %v383, %v598
        %v600 = vpop.f32.mrb[0].mxu0
        %v601 = vadd.f32 %v387, %v600
        %602 = vmatprep.mubr.bf16.mxu0 %v319
        %603 = vmatmul.mubr.bf16.gmra.mrb[0].mxu0 %v318
        %v604 = vpop.f32.mrb[0].mxu0
        %v605 = vadd.f32 %v383, %v604
        %v606 = vpop.f32.mrb[0].mxu0
        %v607 = vadd.f32 %v387, %v606
        %v608 = vpop.f32.mrb[0].mxu0
        %v609 = vadd.f32 %v383, %v608
        %v610 = vpop.f32.mrb[0].mxu0
        %v611 = vadd.f32 %v387, %v610
        %612 = vmatprep.mubr.bf16.mxu0 %v321
        %613 = vmatmul.mubr.bf16.gmra.mrb[0].mxu0 %v320
        %v614 = vpop.f32.mrb[0].mxu0
        %v615 = vadd.f32 %v383, %v614
        %v616 = vpop.f32.mrb[0].mxu0
        %v617 = vadd.f32 %v387, %v616
        %v618 = vpop.f32.mrb[0].mxu0
        %v619 = vadd.f32 %v383, %v618
        %v620 = vpop.f32.mrb[0].mxu0
        %v621 = vadd.f32 %v387, %v620
        %622 = vmatprep.mubr.bf16.mxu0 %v323
        %623 = vmatmul.mubr.bf16.gmra.mrb[0].mxu0 %v322
        %v624 = vpop.f32.mrb[0].mxu0
        %v625 = vadd.f32 %v383, %v624
        %v626 = vpop.f32.mrb[0].mxu0
        %v627 = vadd.f32 %v387, %v626
        %v628 = vpop.f32.mrb[0].mxu0
        %v629 = vadd.f32 %v383, %v628
        %v630 = vpop.f32.mrb[0].mxu0
        %v631 = vadd.f32 %v387, %v630
        %632 = vmatprep.mubr.bf16.mxu0 %v325
        %633 = vmatmul.mubr.bf16.gmra.mrb[0].mxu0 %v324
        %v634 = vpop.f32.mrb[0].mxu0
        %v635 = vadd.f32 %v383, %v634
        %v636 = vpop.f32.mrb[0].mxu0
        %v637 = vadd.f32 %v387, %v636
        %v638 = vpop.f32.mrb[0].mxu0
        %v639 = vadd.f32 %v383, %v638
        %v640 = vpop.f32.mrb[0].mxu0
        %v641 = vadd.f32 %v387, %v640
        %642 = vmatprep.mubr.bf16.mxu0 %v327
        %643 = vmatmul.mubr.bf16.gmra.mrb[0].mxu0 %v326
        %v644 = vpop.f32.mrb[0].mxu0
        %v645 = vadd.f32 %v383, %v644
        %v646 = vpop.f32.mrb[0].mxu0
        %v647 = vadd.f32 %v387, %v646
        %v648 = vpop.f32.mrb[0].mxu0
        %v649 = vadd.f32 %v383, %v648
        %v650 = vpop.f32.mrb[0].mxu0
        %v651 = vadd.f32 %v387, %v650
        %652 = vmatprep.mubr.bf16.mxu0 %v329
        %653 = vmatmul.mubr.bf16.gmra.mrb[0].mxu0 %v328
        %v654 = vpop.f32.mrb[0].mxu0
        %v655 = vadd.f32 %v383, %v654
        %v656 = vpop.f32.mrb[0].mxu0
        %v657 = vadd.f32 %v387, %v656
        %v658 = vpop.f32.mrb[0].mxu0
        %v659 = vadd.f32 %v383, %v658
        %v660 = vpop.f32.mrb[0].mxu0
        %v661 = vadd.f32 %v387, %v660
        %662 = vmatprep.mubr.bf16.mxu0 %v331
        %663 = vmatmul.mubr.bf16.gmra.mrb[0].mxu0 %v330
        %v664 = vpop.f32.mrb[0].mxu0
        %v665 = vadd.f32 %v383, %v664
        %v666 = vpop.f32.mrb[0].mxu0
        %v667 = vadd.f32 %v387, %v666
        %v668 = vpop.f32.mrb[0].mxu0
        %v669 = vadd.f32 %v383, %v668
        %v670 = vpop.f32.mrb[0].mxu0
        %v671 = vadd.f32 %v387, %v670
        %672 = vmatprep.mubr.bf16.mxu0 %v333
        %673 = vmatmul.mubr.bf16.gmra.mrb[0].mxu0 %v332
        %v674 = vpop.f32.mrb[0].mxu0
        %v675 = vadd.f32 %v383, %v674
        %v676 = vpop.f32.mrb[0].mxu0
        %v677 = vadd.f32 %v387, %v676
        %v678 = vpop.f32.mrb[0].mxu0
        %v679 = vadd.f32 %v383, %v678
        %v680 = vpop.f32.mrb[0].mxu0
        %v681 = vadd.f32 %v387, %v680
        %682 = vmatprep.mubr.bf16.mxu0 %v335
        %683 = vmatmul.mubr.bf16.gmra.mrb[0].mxu0 %v334
        %v684 = vpop.f32.mrb[0].mxu0
        %v685 = vadd.f32 %v383, %v684
        %v686 = vpop.f32.mrb[0].mxu0
        %v687 = vadd.f32 %v387, %v686
        %v688 = vpop.f32.mrb[0].mxu0
        %v689 = vadd.f32 %v383, %v688
        %v690 = vpop.f32.mrb[0].mxu0
        %v691 = vadd.f32 %v387, %v690
        %692 = vmatprep.mubr.bf16.mxu0 %v337
        %693 = vmatmul.mubr.bf16.gmra.mrb[0].mxu0 %v336
        %v694 = vpop.f32.mrb[0].mxu0
        %v695 = vadd.f32 %v383, %v694
        %v696 = vpop.f32.mrb[0].mxu0
        %v697 = vadd.f32 %v387, %v696
        %v698 = vpop.f32.mrb[0].mxu0
        %v699 = vadd.f32 %v383, %v698
        %v700 = vpop.f32.mrb[0].mxu0
        %v701 = vadd.f32 %v387, %v700
        %702 = vmatprep.mubr.bf16.mxu0 %v339
        %703 = vmatmul.mubr.bf16.gmra.mrb[0].mxu0 %v338
        %v704 = vpop.f32.mrb[0].mxu0
        %v705 = vadd.f32 %v383, %v704
        %v706 = vpop.f32.mrb[0].mxu0
        %v707 = vadd.f32 %v387, %v706
        %v708 = vpop.f32.mrb[0].mxu0
        %v709 = vadd.f32 %v383, %v708
        %v710 = vpop.f32.mrb[0].mxu0
        %v711 = vadd.f32 %v387, %v710
        %712 = vmatprep.mubr.bf16.mxu0 %v341
        %713 = vmatmul.mubr.bf16.gmra.mrb[0].mxu0 %v340
        %v714 = vpop.f32.mrb[0].mxu0
        %v715 = vadd.f32 %v383, %v714
        %v716 = vpop.f32.mrb[0].mxu0
        %v717 = vadd.f32 %v387, %v716
        %v718 = vpop.f32.mrb[0].mxu0
        %v719 = vadd.f32 %v383, %v718
        %v720 = vpop.f32.mrb[0].mxu0
        %v721 = vadd.f32 %v387, %v720
        %722 = vmatprep.mubr.bf16.mxu0 %v343
        %723 = vmatmul.mubr.bf16.gmra.mrb[0].mxu0 %v342
        %v724 = vpop.f32.mrb[0].mxu0
        %v725 = vadd.f32 %v383, %v724
        %v726 = vpop.f32.mrb[0].mxu0
        %v727 = vadd.f32 %v387, %v726
        %v728 = vpop.f32.mrb[0].mxu0
        %v729 = vadd.f32 %v383, %v728
        %v730 = vpop.f32.mrb[0].mxu0
        %v731 = vadd.f32 %v387, %v730
        %732 = vmatprep.mubr.bf16.mxu0 %v345
        %733 = vmatmul.mubr.bf16.gmra.mrb[0].mxu0 %v344
        %v734 = vpop.f32.mrb[0].mxu0
        %v735 = vadd.f32 %v383, %v734
        %v736 = vpop.f32.mrb[0].mxu0
        %v737 = vadd.f32 %v387, %v736
        %v738 = vpop.f32.mrb[0].mxu0
        %v739 = vadd.f32 %v383, %v738
        %v740 = vpop.f32.mrb[0].mxu0
        %v741 = vadd.f32 %v387, %v740
        %742 = vdwg.mxu0
        %v743 = vpack.c.bf16 %v589, %v585
        %v744 = vpack.c.bf16 %v591, %v587
        %v745 = vpack.c.bf16 %v599, %v595
        %v746 = vpack.c.bf16 %v601, %v597
        %v747 = vpack.c.bf16 %v609, %v605
        %v748 = vpack.c.bf16 %v611, %v607
        %v749 = vpack.c.bf16 %v619, %v615
        %v750 = vpack.c.bf16 %v621, %v617
        %v751 = vpack.c.bf16 %v629, %v625
        %v752 = vpack.c.bf16 %v631, %v627
        %v753 = vpack.c.bf16 %v639, %v635
        %v754 = vpack.c.bf16 %v641, %v637
        %v755 = vpack.c.bf16 %v649, %v645
        %v756 = vpack.c.bf16 %v651, %v647
        %v757 = vpack.c.bf16 %v659, %v655
        %v758 = vpack.c.bf16 %v661, %v657
        %v759 = vpack.c.bf16 %v669, %v665
        %v760 = vpack.c.bf16 %v671, %v667
        %v761 = vpack.c.bf16 %v679, %v675
        %v762 = vpack.c.bf16 %v681, %v677
        %v763 = vpack.c.bf16 %v689, %v685
        %v764 = vpack.c.bf16 %v691, %v687
        %v765 = vpack.c.bf16 %v699, %v695
        %v766 = vpack.c.bf16 %v701, %v697
        %v767 = vpack.c.bf16 %v709, %v705
        %v768 = vpack.c.bf16 %v711, %v707
        %v769 = vpack.c.bf16 %v719, %v715
        %v770 = vpack.c.bf16 %v721, %v717
        %v771 = vpack.c.bf16 %v729, %v725
        %v772 = vpack.c.bf16 %v731, %v727
        %v773 = vpack.c.bf16 %v739, %v735
        %v774 = vpack.c.bf16 %v741, %v737
        %v807 = vunpack.c.l.b16 %v743
        %v808 = vunpack.c.l.b16 %v744
        %v809 = vunpack.c.h.b16 %v743
        %v810 = vunpack.c.h.b16 %v744
        %v811 = vunpack.c.l.b16 %v745
        %v812 = vunpack.c.l.b16 %v746
        %v813 = vunpack.c.h.b16 %v745
        %v814 = vunpack.c.h.b16 %v746
        %v815 = vunpack.c.l.b16 %v747
        %v816 = vunpack.c.l.b16 %v748
        %v817 = vunpack.c.h.b16 %v747
        %v818 = vunpack.c.h.b16 %v748
        %v819 = vunpack.c.l.b16 %v749
        %v820 = vunpack.c.l.b16 %v750
        %v821 = vunpack.c.h.b16 %v749
        %v822 = vunpack.c.h.b16 %v750
        %v823 = vunpack.c.l.b16 %v751
        %v824 = vunpack.c.l.b16 %v752
        %v825 = vunpack.c.h.b16 %v751
        %v826 = vunpack.c.h.b16 %v752
        %v827 = vunpack.c.l.b16 %v753
        %v828 = vunpack.c.l.b16 %v754
        %v829 = vunpack.c.h.b16 %v753
        %v830 = vunpack.c.h.b16 %v754
        %v831 = vunpack.c.l.b16 %v755
        %v832 = vunpack.c.l.b16 %v756
        %v833 = vunpack.c.h.b16 %v755
        %v834 = vunpack.c.h.b16 %v756
        %v835 = vunpack.c.l.b16 %v757
        %v836 = vunpack.c.l.b16 %v758
        %v837 = vunpack.c.h.b16 %v757
        %v838 = vunpack.c.h.b16 %v758
        %v839 = vunpack.c.l.b16 %v759
        %v840 = vunpack.c.l.b16 %v760
        %v841 = vunpack.c.h.b16 %v759
        %v842 = vunpack.c.h.b16 %v760
        %v843 = vunpack.c.l.b16 %v761
        %v844 = vunpack.c.l.b16 %v762
        %v845 = vunpack.c.h.b16 %v761
        %v846 = vunpack.c.h.b16 %v762
        %v847 = vunpack.c.l.b16 %v763
        %v848 = vunpack.c.l.b16 %v764
        %v849 = vunpack.c.h.b16 %v763
        %v850 = vunpack.c.h.b16 %v764
        %v851 = vunpack.c.l.b16 %v765
        %v852 = vunpack.c.l.b16 %v766
        %v853 = vunpack.c.h.b16 %v765
        %v854 = vunpack.c.h.b16 %v766
        %v855 = vunpack.c.l.b16 %v767
        %v856 = vunpack.c.l.b16 %v768
        %v857 = vunpack.c.h.b16 %v767
        %v858 = vunpack.c.h.b16 %v768
        %v859 = vunpack.c.l.b16 %v769
        %v860 = vunpack.c.l.b16 %v770
        %v861 = vunpack.c.h.b16 %v769
        %v862 = vunpack.c.h.b16 %v770
        %v863 = vunpack.c.l.b16 %v771
        %v864 = vunpack.c.l.b16 %v772
        %v865 = vunpack.c.h.b16 %v771
        %v866 = vunpack.c.h.b16 %v772
        %v867 = vunpack.c.l.b16 %v773
        %v868 = vunpack.c.l.b16 %v774
        %v869 = vunpack.c.h.b16 %v773
        %v870 = vunpack.c.h.b16 %v774
        %v871 = vpack.c.b16 %v808, %v807
        %v872 = vpack.c.b16 %v810, %v809
        %v873 = vpack.c.b16 %v812, %v811
        %v874 = vpack.c.b16 %v814, %v813
        %v875 = vpack.c.b16 %v816, %v815
        %v876 = vpack.c.b16 %v818, %v817
        %v877 = vpack.c.b16 %v820, %v819
        %v878 = vpack.c.b16 %v822, %v821
        %v879 = vpack.c.b16 %v824, %v823
        %v880 = vpack.c.b16 %v826, %v825
        %v881 = vpack.c.b16 %v828, %v827
        %v882 = vpack.c.b16 %v830, %v829
        %v883 = vpack.c.b16 %v832, %v831
        %v884 = vpack.c.b16 %v834, %v833
        %v885 = vpack.c.b16 %v836, %v835
        %v886 = vpack.c.b16 %v838, %v837
        %v887 = vpack.c.b16 %v840, %v839
        %v888 = vpack.c.b16 %v842, %v841
        %v889 = vpack.c.b16 %v844, %v843
        %v890 = vpack.c.b16 %v846, %v845
        %v891 = vpack.c.b16 %v848, %v847
        %v892 = vpack.c.b16 %v850, %v849
        %v893 = vpack.c.b16 %v852, %v851
        %v894 = vpack.c.b16 %v854, %v853
        %v895 = vpack.c.b16 %v856, %v855
        %v896 = vpack.c.b16 %v858, %v857
        %v897 = vpack.c.b16 %v860, %v859
        %v898 = vpack.c.b16 %v862, %v861
        %v899 = vpack.c.b16 %v864, %v863
        %v900 = vpack.c.b16 %v866, %v865
        %v901 = vpack.c.b16 %v868, %v867
        %v902 = vpack.c.b16 %v870, %v869
        %935 = vst [vmem:[%s240] sm:$0xff] %v871
        %936 = vst [vmem:[%s240 + $0x8] sm:$0xff] %v872
        %937 = vst [vmem:[%s240 + $0x10] sm:$0xff] %v873
        %938 = vst [vmem:[%s240 + $0x18] sm:$0xff] %v874
        %939 = vst [vmem:[%s240 + $0x20] sm:$0xff] %v875
        %940 = vst [vmem:[%s240 + $0x28] sm:$0xff] %v876
        %941 = vst [vmem:[%s240 + $0x30] sm:$0xff] %v877
        %942 = vst [vmem:[%s240 + $0x38] sm:$0xff] %v878
        %943 = vst [vmem:[%s240 + $0x40] sm:$0xff] %v879
        %944 = vst [vmem:[%s240 + $0x48] sm:$0xff] %v880
        %945 = vst [vmem:[%s240 + $0x50] sm:$0xff] %v881
        %946 = vst [vmem:[%s240 + $0x58] sm:$0xff] %v882
        %947 = vst [vmem:[%s240 + $0x60] sm:$0xff] %v883
        %948 = vst [vmem:[%s240 + $0x68] sm:$0xff] %v884
        %949 = vst [vmem:[%s240 + $0x70] sm:$0xff] %v885
        %950 = vst [vmem:[%s240 + $0x78] sm:$0xff] %v886
        %951 = vst [vmem:[%s240 + $0x80] sm:$0xff] %v887
        %952 = vst [vmem:[%s240 + $0x88] sm:$0xff] %v888
        %953 = vst [vmem:[%s240 + $0x90] sm:$0xff] %v889
        %954 = vst [vmem:[%s240 + $0x98] sm:$0xff] %v890
        %955 = vst [vmem:[%s240 + $0xa0] sm:$0xff] %v891
        %956 = vst [vmem:[%s240 + $0xa8] sm:$0xff] %v892
        %957 = vst [vmem:[%s240 + $0xb0] sm:$0xff] %v893
        %958 = vst [vmem:[%s240 + $0xb8] sm:$0xff] %v894
        %959 = vst [vmem:[%s240 + $0xc0] sm:$0xff] %v895
        %960 = vst [vmem:[%s240 + $0xc8] sm:$0xff] %v896
        %961 = vst [vmem:[%s240 + $0xd0] sm:$0xff] %v897
        %962 = vst [vmem:[%s240 + $0xd8] sm:$0xff] %v898
        %963 = vst [vmem:[%s240 + $0xe0] sm:$0xff] %v899
        %964 = vst [vmem:[%s240 + $0xe8] sm:$0xff] %v900
        %965 = vst [vmem:[%s240 + $0xf0] sm:$0xff] %v901
        %966 = vst [vmem:[%s240 + $0xf8] sm:$0xff] %v902
        %s967 = sand.u32 %s121, 1
        %s968 = scalar_lea.sflag [#allocation4], %s967
        %s969 = sand.u32 %s121, 1
        %s970 = smul.addr %s969, 256
        %s971 = scalar_lea.vmem [#allocation7], %s970
        // Predicated region
        $region41: #{tpu_custom_call.1} parent=31 // pred_check
          %p972 = pneg %p131
        $region42: #{tpu_custom_call.1} parent=31 // pred_check_branch
          %974 = sbr.rel (%p972) target = $region44
        $region43: #{tpu_custom_call.1} parent=31 // pred_region
          %s975 = smul.u32 32, %s25
          %s976 = smul.u32 2, %s26
          %s978 = ssub.s32 4096, 4096
          %979 = vsyncadd %s968, %s978
          %s980 = smul.addr %s975, 6
          %s981 = sadd.s32 %s976, %s980
          %s982 = smul.addr %s981, 64
          %s983 = scalar_lea.hbm %s3, %s982
          %s984 = sshll.u32 %s971, 4
          %s985 = int_to_ptr.vmem [resolvable:$true] %s984
          %990 = dma.vmem_to_hbm [thread:$0]  %s985, 4096, %s983, %s968, 128, 384, 8
        $region44: #{tpu_custom_call.1} parent=31 // pred_fallthru
          _
      $region32: #{tpu_custom_call.1} parent=5 // pred_fallthru
        _
      %p991 = scmp.le.s32.totalorder 2, %s16
      // Predicated region
      $region45: #{tpu_custom_call.1} parent=5 // pred_check
        %p992 = pneg %p991
      $region46: #{tpu_custom_call.1} parent=5 // pred_check_branch
        %994 = sbr.rel (%p992) target = $region48
      $region47: #{tpu_custom_call.1} parent=5 // pred_region
        %s995 = ssub.s32 %s16, 2
        // Predicated region
        $region49: #{tpu_custom_call.1} parent=47 // pred_check
          %p996 = pneg %p137
        $region50: #{tpu_custom_call.1} parent=47 // pred_check_branch
          %998 = sbr.rel (%p996) target = $region52
        $region51: #{tpu_custom_call.1} parent=47 // pred_region
          %s999 = sand.u32 %s122, 1
          %s1000 = scalar_lea.sflag [#allocation4], %s999
          %s1001 = sand.u32 %s122, 1
          %s1002 = smul.addr %s1001, 256
          %s1003 = scalar_lea.vmem [#allocation7], %s1002
          %1004 = dma.done %s1000, 4096
        $region52: #{tpu_custom_call.1} parent=47 // pred_fallthru
          _
      $region48: #{tpu_custom_call.1} parent=5 // pred_fallthru
        _
    $region6: #{tpu_custom_call.1} parent=1 // loop_footer
      %s20 = sadd.s32 1, %s16
    $region7: #{tpu_custom_call.1} parent=1 // loop_footer_branch
      %15 = sbr.rel target = $region3
    $region8: #{tpu_custom_call.1} parent=1 // loop_exit
      _
    %1005 = vsyncpa [#allocation3], 1
    %s1006 = scalar_lea.sflag [#allocation3], 1
    %1007 = vsyncpa %s1006, 1
    %1008 = vsyncpa [#allocation6], 1
    %s1009 = scalar_lea.sflag [#allocation6], 1
    %1010 = vsyncpa %s1009, 1
    %1011 = vsyncpa [#allocation4], 1
    %s1012 = scalar_lea.sflag [#allocation4], 1
    %1013 = vsyncpa %s1012, 1

</llo_original>
